<compile_context>
chip_gen: v7x
topology: tpu7x:2x2x1
jax: 0.10.0
libtpu: 0.0.40
codegen_flags: <defaults>
</compile_context>

<pallas_src>
import functools

import jax
import jax.numpy as jnp
import numpy as np
from jax.experimental import pallas as pl
from jax.experimental.pallas import tpu as pltpu


def _round_up(n, m):
    return ((n + m - 1) // m) * m


def _grouped_matmul_kernel(tile_expert_ref, x_ref, w_ref, g_ref, o_ref):
    """Grid: (num_token_tiles,). One expert per tile (groups are tile-aligned).

    x_ref: (tm, d_in_p)  bf16 routed/padded tokens
    w_ref: (1, d_in_p, d_out_p) bf16 expert weight selected via tile_expert
    g_ref: (tm, 1) f32 per-row top-k gate weight
    o_ref: (tm, d_out_p) f32
    """
    del tile_expert_ref  # only used by the index_maps
    y = jnp.dot(x_ref[...], w_ref[0], preferred_element_type=jnp.float32)
    o_ref[...] = g_ref[...] * y


def grouped_matmul_pallas(tile_expert, x_grp, w_p, g_grp, *, tm, max_tiles):
    """x_grp:(P,d_in_p) bf16, w_p:(E,d_in_p,d_out_p) bf16, g_grp:(P,1) f32."""
    P, d_in_p = x_grp.shape
    E, _, d_out_p = w_p.shape

    # VMEM budget: double-buffered x / weight / gate blocks + f32 output block.
    # TODO(synk): for very large experts (d_in_p*d_out_p bf16 > ~16 MiB) add a
    # K-axis grid dimension with an f32 accumulator so tiles fit v7x's 64 MiB.
    bytes_needed = 2 * (tm * d_in_p * 2 + d_in_p * d_out_p * 2
                        + tm * 128 * 4 + tm * d_out_p * 4)
    vmem_limit = int(min(100 * 2**20, max(32 * 2**20, 1.5 * bytes_needed)))

    return pl.pallas_call(
        _grouped_matmul_kernel,
        out_shape=jax.ShapeDtypeStruct((P, d_out_p), jnp.float32),
        grid_spec=pltpu.PrefetchScalarGridSpec(
            num_scalar_prefetch=1,
            grid=(max_tiles,),
            in_specs=[
                pl.BlockSpec((tm, d_in_p), lambda t, te: (t, 0)),          # x tile
                pl.BlockSpec((1, d_in_p, d_out_p),
                             lambda t, te: (te[t], 0, 0)),                  # A_e
                pl.BlockSpec((tm, 1), lambda t, te: (t, 0)),                # gates
            ],
            out_specs=pl.BlockSpec((tm, d_out_p), lambda t, te: (t, 0)),
        ),
        compiler_params=pltpu.CompilerParams(
            dimension_semantics=("parallel",),
            vmem_limit_bytes=vmem_limit),
    )(tile_expert, x_grp, w_p, g_grp)


def aux_loss(gate_logits, dense_gates, num_experts):
    # Plain-JAX glue reproducing load_balancing_loss_fn / compute_aux_loss.
    count = gate_logits.shape[0]
    probs = jax.nn.softmax(gate_logits, axis=1).sum(0)
    freq = (dense_gates > 0).astype(jnp.float32).sum(0)
    lsesq = jnp.sum(jax.scipy.special.logsumexp(gate_logits, axis=-1) ** 2)
    switchloss = num_experts * jnp.sum(
        probs / jnp.sum(jnp.abs(probs)) * (freq / jnp.sum(jnp.abs(freq))))
    zloss = lsesq / count
    return switchloss + 0.1 * zloss


@functools.partial(jax.jit, static_argnames=("k", "tm", "compute_dtype"))
def cola_moe_forward(x, gate_w, expert_w, expert_b, *, k, tm=256,
                     compute_dtype=jnp.bfloat16):
    batch_shape = x.shape[:-1]
    d_in = x.shape[-1]
    x2 = x.reshape(-1, d_in)
    T = x2.shape[0]
    E, _, d_out = expert_w.shape

    # ---- gating (tiny; plain JAX, kept in f32 for gate-weight precision) ----
    xf = x2.astype(jnp.float32)
    gate_logits = xf @ gate_w.T.astype(jnp.float32)                  # (T, E)
    topk_vals, topk_idx = jax.lax.top_k(gate_logits, k)
    topk_w = jax.nn.softmax(topk_vals, axis=-1)                      # (T, k) f32

    dense_gates = jnp.zeros((T, E), jnp.float32).at[
        jnp.arange(T)[:, None], topk_idx].add(topk_w)
    loss = aux_loss(gate_logits, dense_gates, E)
    # TODO(synk): eval-mode bookkeeping (update_info, gate ppl attrs) are
    # host-side side effects on parameters and are not reproduced.

    # ---- route: sort (token, expert) pairs by expert, tile-align groups ----
    Tk = T * k
    flat_e = topk_idx.reshape(Tk).astype(jnp.int32)
    flat_w = topk_w.reshape(Tk)
    flat_t = jnp.repeat(jnp.arange(T, dtype=jnp.int32), k)

    order = jnp.argsort(flat_e)
    s_e, s_t, s_w = flat_e[order], flat_t[order], flat_w[order]

    counts = jnp.bincount(flat_e, length=E)                          # (E,)
    tiles_per_e = (counts + tm - 1) // tm
    pad_off = (jnp.cumsum(tiles_per_e) - tiles_per_e) * tm           # rows
    grp_off = jnp.cumsum(counts) - counts
    dest = pad_off[s_e] + (jnp.arange(Tk) - grp_off[s_e])            # (Tk,)

    max_tiles = -(-Tk // tm) + E                                     # static bound
    P = max_tiles * tm

    d_in_p = _round_up(d_in, 128)
    d_out_p = _round_up(d_out, 128)

    x_p = jnp.pad(x2, ((0, 0), (0, d_in_p - d_in))).astype(compute_dtype)
    x_grp = jnp.zeros((P, d_in_p), compute_dtype).at[dest].set(x_p[s_t])
    g_grp = jnp.zeros((P, 1), jnp.float32).at[dest, 0].set(s_w)
    t_grp = jnp.full((P,), T, jnp.int32).at[dest].set(s_t)           # T = drop

    tile_expert = jnp.minimum(
        jnp.searchsorted(jnp.cumsum(tiles_per_e),
                         jnp.arange(max_tiles), side="right"),
        E - 1).astype(jnp.int32)

    w_p = jnp.pad(expert_w, ((0, 0), (0, d_in_p - d_in),
                             (0, d_out_p - d_out))).astype(compute_dtype)

    # ---- Pallas grouped matmul over routed tokens ----
    y_grp = grouped_matmul_pallas(tile_expert, x_grp, w_p, g_grp,
                                  tm=tm, max_tiles=max_tiles)

    # ---- un-route: scatter-add back to token order; add folded bias ----
    out = jnp.zeros((T, d_out_p), jnp.float32).at[t_grp].add(y_grp, mode="drop")
    out = out[:, :d_out] + dense_gates @ expert_b.astype(jnp.float32)
    return out.reshape(*batch_shape, d_out), loss


def ref_forward(x, gate_w, expert_w, expert_b, k):
    batch_shape = x.shape[:-1]
    x2 = x.reshape(-1, x.shape[-1])
    d_out = expert_w.shape[-1]
    gate_logits = x2 @ gate_w.T
    topk_vals, topk_idx = jax.lax.top_k(gate_logits, k)
    topk_w = jax.nn.softmax(topk_vals.astype(jnp.float32), axis=-1)
    out = jnp.zeros((x2.shape[0], d_out), jnp.float32)
    for kk in range(k):
        idx = topk_idx[:, kk]
        w = topk_w[:, kk]
        ye = jnp.einsum("td,tdo->to", x2, expert_w[idx]) + expert_b[idx]
        out = out + w[:, None] * ye
    return out.reshape(*batch_shape, d_out)


if __name__ == "__main__":
    key = jax.random.PRNGKey(0)
    B, S, D_IN, D_OUT, E, K = 2, 8, 32, 32, 4, 2
    TM = 256  # token tile (multiple of 128, per perf review)

    k1, k2, k3, k4 = jax.random.split(key, 4)
    x = jax.random.normal(k1, (B, S, D_IN), jnp.float32)
    # nn.Linear(in_features, E, bias=False) weight is (E, in_features); the
    # module zero-inits it — use small random values so gating is nontrivial.
    gate_w = 0.1 * jax.random.normal(k2, (E, D_IN), jnp.float32)
    # Each expert's CoLA operator A: (d_in, d_out); bias b: (d_out,)
    expert_w = jax.random.normal(k3, (E, D_IN, D_OUT), jnp.float32) / np.sqrt(D_IN)
    expert_b = 0.01 * jax.random.normal(k4, (E, D_OUT), jnp.float32)

    out, loss = cola_moe_forward(x, gate_w, expert_w, expert_b, k=K, tm=TM)
    out = jax.block_until_ready(out)
    loss = jax.block_until_ready(loss)

    ref = ref_forward(x, gate_w, expert_w, expert_b, K)
    # bf16 matmul inputs (f32 accumulate) vs f32 reference -> loose-ish tol.
    np.testing.assert_allclose(np.asarray(out), np.asarray(ref),
                               rtol=5e-2, atol=5e-2)
    print("KERNEL_OK")
</pallas_src>

<mosaic_0001>
module attributes {stable_mosaic.version = 11 : i64} {
  func.func private @main(%arg0: i32) attributes {dimension_semantics = [#tpu.dimension_semantics<core_parallel>], iteration_bounds = array<i64: 2>, tpu.core_type = #tpu.core_type<sc_scalar_subcore>, window_params = []} {
    return
  }
}

module attributes {stable_mosaic.version = 11 : i64} {
  func.func private @main(%arg0: i32) attributes {dimension_semantics = [#tpu.dimension_semantics<core_parallel>], iteration_bounds = array<i64: 2>, tpu.core_type = #tpu.core_type<sc_scalar_subcore>, window_params = []} {
    return
  }
}

module attributes {stable_mosaic.version = 11 : i64} {
  func.func @_grouped_matmul_kernel(%arg0: i32, %arg1: memref<5xi32, #tpu.memory_space<smem>>, %arg2: memref<256x128xbf16, #tpu.memory_space<vmem>>, %arg3: memref<1x128x128xbf16, #tpu.memory_space<vmem>>, %arg4: memref<256x1xf32, #tpu.memory_space<vmem>>, %arg5: memref<256x128xf32, #tpu.memory_space<vmem>>) attributes {dimension_semantics = [#tpu.dimension_semantics<parallel>], iteration_bounds = array<i64: 5>, scalar_prefetch = 1 : i64, scratch_operands = 0 : i64, tpu.core_type = #tpu.core_type<tc>, window_params = [{transform_indices = @transform_0, window_bounds = array<i64: 256, 128>}, {transform_indices = @transform_1, window_bounds = array<i64: 1, 128, 128>}, {transform_indices = @transform_2, window_bounds = array<i64: 256, 1>}, {transform_indices = @transform_3, window_bounds = array<i64: 256, 128>}]} {
    %c0 = arith.constant 0 : index
    %c0_0 = arith.constant 0 : index
    %0 = vector.load %arg2[%c0, %c0_0] : memref<256x128xbf16, #tpu.memory_space<vmem>>, vector<256x128xbf16>
    %c0_1 = arith.constant 0 : index
    %c0_2 = arith.constant 0 : index
    %c0_3 = arith.constant 0 : index
    %1 = vector.load %arg3[%c0_1, %c0_2, %c0_3] : memref<1x128x128xbf16, #tpu.memory_space<vmem>>, vector<1x128x128xbf16>
    %2 = vector.shape_cast %1 : vector<1x128x128xbf16> to vector<128x128xbf16>
    %cst = arith.constant dense<0.000000e+00> : vector<256x128xf32>
    %3 = tpu.matmul %0, %2, %cst {dimension_numbers = #tpu.dot_dimension_numbers<[1], [0], [0], [1], [0, 0, 1, 1], [], []>} : vector<256x128xbf16>, vector<128x128xbf16>, vector<256x128xf32> -> vector<256x128xf32>
    %c0_4 = arith.constant 0 : index
    %c0_5 = arith.constant 0 : index
    %4 = vector.load %arg4[%c0_4, %c0_5] : memref<256x1xf32, #tpu.memory_space<vmem>>, vector<256x1xf32>
    %5 = vector.broadcast %4 : vector<256x1xf32> to vector<256x128xf32>
    %6 = arith.mulf %5, %3 : vector<256x128xf32>
    %c0_6 = arith.constant 0 : index
    %c0_7 = arith.constant 0 : index
    %7 = vector.load %arg5[%c0_6, %c0_7] : memref<256x128xf32, #tpu.memory_space<vmem>>, vector<256x128xf32>
    tpu.vector_store %arg5[%c0_6, %c0_7], %6 {strides = array<i32>} : memref<256x128xf32, #tpu.memory_space<vmem>>, vector<256x128xf32>,
    return
  }
  func.func @transform_0(%arg0: i32, %arg1: memref<5xi32, #tpu.memory_space<smem>>) -> (i32, i32) {
    %c0_i32 = arith.constant 0 : i32
    %c0_i32_0 = arith.constant 0 : i32
    return %arg0, %c0_i32 : i32, i32
  }
  func.func @transform_1(%arg0: i32, %arg1: memref<5xi32, #tpu.memory_space<smem>>) -> (i32, i32, i32) {
    %0 = arith.index_cast %arg0 : i32 to index
    %1 = memref.load %arg1[%0] : memref<5xi32, #tpu.memory_space<smem>>
    %c0_i32 = arith.constant 0 : i32
    %c0_i32_0 = arith.constant 0 : i32
    %c0_i32_1 = arith.constant 0 : i32
    return %1, %c0_i32, %c0_i32_0 : i32, i32, i32
  }
  func.func @transform_2(%arg0: i32, %arg1: memref<5xi32, #tpu.memory_space<smem>>) -> (i32, i32) {
    %c0_i32 = arith.constant 0 : i32
    %c0_i32_0 = arith.constant 0 : i32
    return %arg0, %c0_i32 : i32, i32
  }
  func.func @transform_3(%arg0: i32, %arg1: memref<5xi32, #tpu.memory_space<smem>>) -> (i32, i32) {
    %c0_i32 = arith.constant 0 : i32
    %c0_i32_0 = arith.constant 0 : i32
    return %arg0, %c0_i32 : i32, i32
  }
}

</mosaic_0001>

<llo_original>
// kernel: custom-call.2
$region0: #{custom-call.2}
  %s0 = inlined_call_operand.vmem [shape: u32[5], index: 0, kind: output, shape index: {}]

// kernel: cola_moe_forward.1
$region0: #{cola_moe_forward.1}
  #allocation0 [shape = 'u32[]', space=smem, size = 0x4, offset = 0x4, fixed_abs, tag = 'smem constant byte address 0x4 - core index']
  #allocation1 [shape = 'u32[144,128]{1,0:T(1,128)}', space=vmem, size = 0x12000, scoped, tag = 'internal scratch']
  #allocation2 [shape = 's32[1]{0}', space=sflag, size = 0x4, scoped, tag = 'scoped memory for cola_moe_forward.1']
  #allocation3 [shape = 'u8[512]{0}', space=smem, size = 0x200, scoped, tag = 'prefetched SMEM operand 0']
  %s0 = inlined_call_operand.vmem [shape: s32[5], index: 0, kind: input, shape index: {}]
  %s1 = inlined_call_operand.vmem [shape: bf16[1280,128], index: 1, kind: input, shape index: {}]
  %s2 = inlined_call_operand.vmem [shape: bf16[4,128,128], index: 2, kind: input, shape index: {}]
  %s3 = inlined_call_operand.vmem [shape: f32[1280,1], index: 3, kind: input, shape index: {}]
  %s4 = inlined_call_operand.vmem [shape: f32[1280,128], index: 4, kind: output, shape index: {}]
  %s5 = sld [smem:[#allocation0]]
  $region45: #{cola_moe_forward.1} parent=0
    _
  %s7 = ssub.s32 1, %s5
  %s8 = scalar_select 0, %s7, %s5
  %s9 = sshll.u32 %s0, 4
  %s10 = int_to_ptr.vmem [resolvable:$true] %s9
  %12 = dma.vmem_to_smem %s10, 16, [#allocation3], [#allocation2]
  %13 = dma.done [#allocation2], 16
  %14 = sfence
  loop: start=0, step=1, limit=7
  $region2: #{cola_moe_forward.1} parent=0 // loop_pre_header
    _
  $region3: #{cola_moe_forward.1} parent=0 // loop_header
    %s16 = sphi 0, %s20
    %p17 = scmp.ge.s32.totalorder %s16, 7
    %s26 = sphi 0, %s28
    %s29 = sphi 0, %s26
    %s30 = sphi 0, %s29
    %s46 = sphi 0, %s30
    %s54 = sphi 0, %s56
    %s57 = sphi 0, %s54
    %s58 = sphi 0, %s57
    %s74 = sphi 0, %s58
    %s80 = sphi 0, %s82
    %s83 = sphi 0, %s80
    %s84 = sphi 0, %s83
    %s100 = sphi 0, %s84
    %s106 = sphi 0, %s108
    %s109 = sphi 0, %s106
    %s110 = sphi 0, %s109
    %s126 = sphi 0, %s110
  $region4: #{cola_moe_forward.1} parent=0 // loop_header_branch
    %19 = sbr.rel (%p17) target = $region8
  $region5: #{cola_moe_forward.1} parent=0 // loop_body
    %s21 = ssub.s32 %s16, 1
    %s22 = ssub.s32 %s16, 2
    %s23 = sadd.s32 %s16, 1
    %s24 = ssub.s32 %s16, %s23
    %p25 = scmp.eq.s32.totalorder %s24, 0
    %s27 = sadd.s32 %s26, 1
    %s28 = scalar_select %p25, %s26, %s27
    %p31 = pneg %p25
    %p32 = scmp.eq.s32.totalorder %s16, 4
    %p33 = por %p31, %p32
    %p34 = scmp.ne.s32.totalorder %s26, %s29
    %p35 = scmp.eq.s32.totalorder %s16, 0
    %p36 = por %p34, %p35
    %p37 = scmp.ne.s32.totalorder %s26, %s29
    %p38 = scmp.eq.s32.totalorder %s21, 4
    %p39 = por %p37, %p38
    %p40 = scmp.ne.s32.totalorder %s29, %s30
    %p41 = scmp.eq.s32.totalorder %s21, 0
    %p42 = por %p40, %p41
    %p43 = scmp.ne.s32.totalorder %s29, %s30
    %p44 = scmp.eq.s32.totalorder %s22, 4
    %p45 = por %p43, %p44
    %p47 = scmp.ne.s32.totalorder %s30, %s46
    %p48 = scmp.eq.s32.totalorder %s22, 0
    %p49 = por %p47, %p48
    %s50 = sld [smem:[#allocation3 + %s16]]
    %s51 = sld [smem:[#allocation3 + %s23]]
    %s52 = ssub.s32 %s50, %s51
    %p53 = scmp.eq.s32.totalorder %s52, 0
    %s55 = sadd.s32 %s54, 1
    %s56 = scalar_select %p53, %s54, %s55
    %p59 = pneg %p53
    %p60 = scmp.eq.s32.totalorder %s16, 4
    %p61 = por %p59, %p60
    %p62 = scmp.ne.s32.totalorder %s54, %s57
    %p63 = scmp.eq.s32.totalorder %s16, 0
    %p64 = por %p62, %p63
    %p65 = scmp.ne.s32.totalorder %s54, %s57
    %p66 = scmp.eq.s32.totalorder %s21, 4
    %p67 = por %p65, %p66
    %p68 = scmp.ne.s32.totalorder %s57, %s58
    %p69 = scmp.eq.s32.totalorder %s21, 0
    %p70 = por %p68, %p69
    %p71 = scmp.ne.s32.totalorder %s57, %s58
    %p72 = scmp.eq.s32.totalorder %s22, 4
    %p73 = por %p71, %p72
    %p75 = scmp.ne.s32.totalorder %s58, %s74
    %p76 = scmp.eq.s32.totalorder %s22, 0
    %p77 = por %p75, %p76
    %s78 = ssub.s32 %s16, %s23
    %p79 = scmp.eq.s32.totalorder %s78, 0
    %s81 = sadd.s32 %s80, 1
    %s82 = scalar_select %p79, %s80, %s81
    %p85 = pneg %p79
    %p86 = scmp.eq.s32.totalorder %s16, 4
    %p87 = por %p85, %p86
    %p88 = scmp.ne.s32.totalorder %s80, %s83
    %p89 = scmp.eq.s32.totalorder %s16, 0
    %p90 = por %p88, %p89
    %p91 = scmp.ne.s32.totalorder %s80, %s83
    %p92 = scmp.eq.s32.totalorder %s21, 4
    %p93 = por %p91, %p92
    %p94 = scmp.ne.s32.totalorder %s83, %s84
    %p95 = scmp.eq.s32.totalorder %s21, 0
    %p96 = por %p94, %p95
    %p97 = scmp.ne.s32.totalorder %s83, %s84
    %p98 = scmp.eq.s32.totalorder %s22, 4
    %p99 = por %p97, %p98
    %p101 = scmp.ne.s32.totalorder %s84, %s100
    %p102 = scmp.eq.s32.totalorder %s22, 0
    %p103 = por %p101, %p102
    %s104 = ssub.s32 %s16, %s23
    %p105 = scmp.eq.s32.totalorder %s104, 0
    %s107 = sadd.s32 %s106, 1
    %s108 = scalar_select %p105, %s106, %s107
    %p111 = pneg %p105
    %p112 = scmp.eq.s32.totalorder %s16, 4
    %p113 = por %p111, %p112
    %p114 = scmp.ne.s32.totalorder %s106, %s109
    %p115 = scmp.eq.s32.totalorder %s16, 0
    %p116 = por %p114, %p115
    %p117 = scmp.ne.s32.totalorder %s106, %s109
    %p118 = scmp.eq.s32.totalorder %s21, 4
    %p119 = por %p117, %p118
    %p120 = scmp.ne.s32.totalorder %s109, %s110
    %p121 = scmp.eq.s32.totalorder %s21, 0
    %p122 = por %p120, %p121
    %p123 = scmp.ne.s32.totalorder %s109, %s110
    %p124 = scmp.eq.s32.totalorder %s22, 4
    %p125 = por %p123, %p124
    %p127 = scmp.ne.s32.totalorder %s110, %s126
    %p128 = scmp.eq.s32.totalorder %s22, 0
    %p129 = por %p127, %p128
    %p130 = scmp.le.s32.totalorder 1, %s16
    %p131 = scmp.lt.s32.totalorder %s16, 6
    %p132 = pnand %p130, %p131
    %p133 = pneg %p132
    // Predicated region
    $region9: #{cola_moe_forward.1} parent=5 // pred_check
      _
    $region10: #{cola_moe_forward.1} parent=5 // pred_check_branch
      %135 = sbr.rel (%p132) target = $region12
    $region11: #{cola_moe_forward.1} parent=5 // pred_region
      %s136 = ssub.s32 %s16, 1
    $region12: #{cola_moe_forward.1} parent=5 // pred_fallthru
      _
    %p137 = scmp.lt.s32.totalorder %s16, 5
    // Predicated region
    $region13: #{cola_moe_forward.1} parent=5 // pred_check
      %p138 = pneg %p137
    $region14: #{cola_moe_forward.1} parent=5 // pred_check_branch
      %140 = sbr.rel (%p138) target = $region16
    $region15: #{cola_moe_forward.1} parent=5 // pred_region
      // Predicated region
      $region17: #{cola_moe_forward.1} parent=15 // pred_check
        %p141 = pneg %p36
      $region18: #{cola_moe_forward.1} parent=15 // pred_check_branch
        %143 = sbr.rel (%p141) target = $region20
      $region19: #{cola_moe_forward.1} parent=15 // pred_region
        %s144 = smul.u32 32, %s16
        %p145 = scmp.lt.s32.totalorder %s144, 159
        %s146 = scalar_select %p145, %s144, 159
        %s147 = smul.addr %s146, 4
        %s148 = scalar_lea.vmem %s1, %s147
        %s149 = smul.u32 32, %s16
      $region20: #{cola_moe_forward.1} parent=15 // pred_fallthru
        _
      // Predicated region
      $region21: #{cola_moe_forward.1} parent=15 // pred_check
        %p150 = pneg %p64
      $region22: #{cola_moe_forward.1} parent=15 // pred_check_branch
        %152 = sbr.rel (%p150) target = $region24
      $region23: #{cola_moe_forward.1} parent=15 // pred_region
        %s153 = sld [smem:[#allocation3 + %s16]]
        %p154 = scmp.lt.s32.totalorder %s153, 3
        %s155 = scalar_select %p154, %s153, 3
        %s156 = smul.addr %s155, 16
        %s157 = smul.addr %s156, 4
        %s158 = scalar_lea.vmem %s2, %s157
        %s159 = sld [smem:[#allocation3 + %s16]]
      $region24: #{cola_moe_forward.1} parent=15 // pred_fallthru
        _
      // Predicated region
      $region25: #{cola_moe_forward.1} parent=15 // pred_check
        %p160 = pneg %p90
      $region26: #{cola_moe_forward.1} parent=15 // pred_check_branch
        %162 = sbr.rel (%p160) target = $region28
      $region27: #{cola_moe_forward.1} parent=15 // pred_region
        %s163 = smul.u32 32, %s16
        %p164 = scmp.lt.s32.totalorder %s163, 159
        %s165 = scalar_select %p164, %s163, 159
        %s166 = smul.addr %s165, 8
        %s167 = scalar_lea.vmem %s3, %s166
        %s168 = smul.u32 32, %s16
      $region28: #{cola_moe_forward.1} parent=15 // pred_fallthru
        _
    $region16: #{cola_moe_forward.1} parent=5 // pred_fallthru
      _
    %p169 = scmp.le.s32.totalorder 1, %s16
    %p170 = scmp.lt.s32.totalorder %s16, 6
    %p171 = pnand %p169, %p170
    %p172 = pneg %p171
    // Predicated region
    $region29: #{cola_moe_forward.1} parent=5 // pred_check
      _
    $region30: #{cola_moe_forward.1} parent=5 // pred_check_branch
      %174 = sbr.rel (%p171) target = $region32
    $region31: #{cola_moe_forward.1} parent=5 // pred_region
      %s175 = ssub.s32 %s16, 1
      %s176 = smul.u32 32, %s21
      %p177 = scmp.lt.s32.totalorder %s176, 159
      %s178 = scalar_select %p177, %s176, 159
      %s179 = smul.addr %s178, 4
      %s180 = scalar_lea.vmem %s1, %s179
      %p181 = pneg %p42
      %p182 = pneg %p39
      %s183 = sld [smem:[#allocation3 + %s21]]
      %p184 = scmp.lt.s32.totalorder %s183, 3
      %s185 = scalar_select %p184, %s183, 3
      %s186 = smul.addr %s185, 16
      %s187 = smul.addr %s186, 4
      %s188 = scalar_lea.vmem %s2, %s187
      %p189 = pneg %p70
      %p190 = pneg %p67
      %s191 = smul.u32 32, %s21
      %p192 = scmp.lt.s32.totalorder %s191, 159
      %s193 = scalar_select %p192, %s191, 159
      %s194 = smul.addr %s193, 8
      %s195 = scalar_lea.vmem %s3, %s194
      %p196 = pneg %p96
      %p197 = pneg %p93
      %p198 = pneg %p122
      %p199 = pneg %p119
      %s200 = smul.u32 32, %s21
      %p201 = scmp.lt.s32.totalorder %s200, 159
      %s202 = scalar_select %p201, %s200, 159
      %s203 = smul.addr %s202, 8
      %s204 = scalar_lea.vmem %s4, %s203
      %s205 = smul.u32 32, %s21
      %p206 = scmp.lt.s32.totalorder %s205, 159
      %s207 = scalar_select %p206, %s205, 159
      %s208 = smul.addr %s207, 4
      %s209 = scalar_lea.vmem %s1, %s208
      %s210 = smul.u32 32, %s21
      %s211 = sld [smem:[#allocation3 + %s21]]
      %p212 = scmp.lt.s32.totalorder %s211, 3
      %s213 = scalar_select %p212, %s211, 3
      %s214 = smul.addr %s213, 16
      %s215 = smul.addr %s214, 4
      %s216 = scalar_lea.vmem %s2, %s215
      %s217 = sld [smem:[#allocation3 + %s21]]
      %s218 = smul.u32 32, %s21
      %p219 = scmp.lt.s32.totalorder %s218, 159
      %s220 = scalar_select %p219, %s218, 159
      %s221 = smul.addr %s220, 8
      %s222 = scalar_lea.vmem %s3, %s221
      %s223 = smul.u32 32, %s21
      %s224 = smul.u32 32, %s21
      %p225 = scmp.lt.s32.totalorder %s224, 159
      %s226 = scalar_select %p225, %s224, 159
      %s227 = smul.addr %s226, 8
      %s228 = scalar_lea.vmem %s4, %s227
      %s229 = smul.u32 32, %s21
      %v231 = vld [vmem:[%s209] sm:$0xf]
      %v232 = vld [vmem:[%s209 + $0x4] sm:$0xf]
      %v233 = vld [vmem:[%s209 + $0x8] sm:$0xf]
      %v234 = vld [vmem:[%s209 + $0xc] sm:$0xf]
      %v235 = vld [vmem:[%s209 + $0x10] sm:$0xf]
      %v236 = vld [vmem:[%s209 + $0x14] sm:$0xf]
      %v237 = vld [vmem:[%s209 + $0x18] sm:$0xf]
      %v238 = vld [vmem:[%s209 + $0x1c] sm:$0xf]
      %v239 = vld [vmem:[%s209 + $0x20] sm:$0xf]
      %v240 = vld [vmem:[%s209 + $0x24] sm:$0xf]
      %v241 = vld [vmem:[%s209 + $0x28] sm:$0xf]
      %v242 = vld [vmem:[%s209 + $0x2c] sm:$0xf]
      %v243 = vld [vmem:[%s209 + $0x30] sm:$0xf]
      %v244 = vld [vmem:[%s209 + $0x34] sm:$0xf]
      %v245 = vld [vmem:[%s209 + $0x38] sm:$0xf]
      %v246 = vld [vmem:[%s209 + $0x3c] sm:$0xf]
      %v247 = vld [vmem:[%s209 + $0x40] sm:$0xf]
      %v248 = vld [vmem:[%s209 + $0x44] sm:$0xf]
      %v249 = vld [vmem:[%s209 + $0x48] sm:$0xf]
      %v250 = vld [vmem:[%s209 + $0x4c] sm:$0xf]
      %v251 = vld [vmem:[%s209 + $0x50] sm:$0xf]
      %v252 = vld [vmem:[%s209 + $0x54] sm:$0xf]
      %v253 = vld [vmem:[%s209 + $0x58] sm:$0xf]
      %v254 = vld [vmem:[%s209 + $0x5c] sm:$0xf]
      %v255 = vld [vmem:[%s209 + $0x60] sm:$0xf]
      %v256 = vld [vmem:[%s209 + $0x64] sm:$0xf]
      %v257 = vld [vmem:[%s209 + $0x68] sm:$0xf]
      %v258 = vld [vmem:[%s209 + $0x6c] sm:$0xf]
      %v259 = vld [vmem:[%s209 + $0x70] sm:$0xf]
      %v260 = vld [vmem:[%s209 + $0x74] sm:$0xf]
      %v261 = vld [vmem:[%s209 + $0x78] sm:$0xf]
      %v262 = vld [vmem:[%s209 + $0x7c] sm:$0xf]
      %v263 = vld [vmem:[%s216] sm:$0xf]
      %v264 = vld [vmem:[%s216 + $0x4] sm:$0xf]
      %v265 = vld [vmem:[%s216 + $0x8] sm:$0xf]
      %v266 = vld [vmem:[%s216 + $0xc] sm:$0xf]
      %v267 = vld [vmem:[%s216 + $0x10] sm:$0xf]
      %v268 = vld [vmem:[%s216 + $0x14] sm:$0xf]
      %v269 = vld [vmem:[%s216 + $0x18] sm:$0xf]
      %v270 = vld [vmem:[%s216 + $0x1c] sm:$0xf]
      %v271 = vld [vmem:[%s216 + $0x20] sm:$0xf]
      %v272 = vld [vmem:[%s216 + $0x24] sm:$0xf]
      %v273 = vld [vmem:[%s216 + $0x28] sm:$0xf]
      %v274 = vld [vmem:[%s216 + $0x2c] sm:$0xf]
      %v275 = vld [vmem:[%s216 + $0x30] sm:$0xf]
      %v276 = vld [vmem:[%s216 + $0x34] sm:$0xf]
      %v277 = vld [vmem:[%s216 + $0x38] sm:$0xf]
      %v278 = vld [vmem:[%s216 + $0x3c] sm:$0xf]
      %v311 = vunpack.c.l.b16 %v231
      %v312 = vunpack.c.l.b16 %v232
      %v313 = vunpack.c.l.b16 %v233
      %v314 = vunpack.c.l.b16 %v234
      %v315 = vunpack.c.l.b16 %v235
      %v316 = vunpack.c.l.b16 %v236
      %v317 = vunpack.c.l.b16 %v237
      %v318 = vunpack.c.l.b16 %v238
      %v319 = vunpack.c.l.b16 %v239
      %v320 = vunpack.c.l.b16 %v240
      %v321 = vunpack.c.l.b16 %v241
      %v322 = vunpack.c.l.b16 %v242
      %v323 = vunpack.c.l.b16 %v243
      %v324 = vunpack.c.l.b16 %v244
      %v325 = vunpack.c.l.b16 %v245
      %v326 = vunpack.c.l.b16 %v246
      %v327 = vunpack.c.l.b16 %v247
      %v328 = vunpack.c.l.b16 %v248
      %v329 = vunpack.c.l.b16 %v249
      %v330 = vunpack.c.l.b16 %v250
      %v331 = vunpack.c.l.b16 %v251
      %v332 = vunpack.c.l.b16 %v252
      %v333 = vunpack.c.l.b16 %v253
      %v334 = vunpack.c.l.b16 %v254
      %v335 = vunpack.c.l.b16 %v255
      %v336 = vunpack.c.l.b16 %v256
      %v337 = vunpack.c.l.b16 %v257
      %v338 = vunpack.c.l.b16 %v258
      %v339 = vunpack.c.l.b16 %v259
      %v340 = vunpack.c.l.b16 %v260
      %v341 = vunpack.c.l.b16 %v261
      %v342 = vunpack.c.l.b16 %v262
      %v343 = vpack.c.b16 %v312, %v311
      %v344 = vpack.c.b16 %v314, %v313
      %v345 = vpack.c.b16 %v316, %v315
      %v346 = vpack.c.b16 %v318, %v317
      %v347 = vpack.c.b16 %v320, %v319
      %v348 = vpack.c.b16 %v322, %v321
      %v349 = vpack.c.b16 %v324, %v323
      %v350 = vpack.c.b16 %v326, %v325
      %v351 = vpack.c.b16 %v328, %v327
      %v352 = vpack.c.b16 %v330, %v329
      %v353 = vpack.c.b16 %v332, %v331
      %v354 = vpack.c.b16 %v334, %v333
      %v355 = vpack.c.b16 %v336, %v335
      %v356 = vpack.c.b16 %v338, %v337
      %v357 = vpack.c.b16 %v340, %v339
      %v358 = vpack.c.b16 %v342, %v341
      %v391 = vunpack.c.l.b16 %v263
      %v392 = vunpack.c.l.b16 %v264
      %v393 = vunpack.c.l.b16 %v265
      %v394 = vunpack.c.l.b16 %v266
      %v395 = vunpack.c.l.b16 %v267
      %v396 = vunpack.c.l.b16 %v268
      %v397 = vunpack.c.l.b16 %v269
      %v398 = vunpack.c.l.b16 %v270
      %v399 = vunpack.c.l.b16 %v271
      %v400 = vunpack.c.l.b16 %v272
      %v401 = vunpack.c.l.b16 %v273
      %v402 = vunpack.c.l.b16 %v274
      %v403 = vunpack.c.l.b16 %v275
      %v404 = vunpack.c.l.b16 %v276
      %v405 = vunpack.c.l.b16 %v277
      %v406 = vunpack.c.l.b16 %v278
      %v407 = vpack.c.b16 %v392, %v391
      %v408 = vpack.c.b16 %v394, %v393
      %v409 = vpack.c.b16 %v396, %v395
      %v410 = vpack.c.b16 %v398, %v397
      %v411 = vpack.c.b16 %v400, %v399
      %v412 = vpack.c.b16 %v402, %v401
      %v413 = vpack.c.b16 %v404, %v403
      %v414 = vpack.c.b16 %v406, %v405
      %423 = vmatprep.subr.bf16.mxu0 0
      %424 = vmatpush1.bf16.msra.mxu0 %v407
      %425 = vmatprep.subr.bf16.mxu0 0
      %426 = vmatpush1.bf16.msra.mxu0 %v408
      %427 = vmatprep.subr.bf16.mxu0 0
      %428 = vmatpush1.bf16.msra.mxu0 %v409
      %429 = vmatprep.subr.bf16.mxu0 0
      %430 = vmatpush1.bf16.msra.mxu0 %v410
      %431 = vmatprep.subr.bf16.mxu0 0
      %432 = vmatpush1.bf16.msra.mxu0 %v411
      %433 = vmatprep.subr.bf16.mxu0 0
      %434 = vmatpush1.bf16.msra.mxu0 %v412
      %435 = vmatprep.subr.bf16.mxu0 0
      %436 = vmatpush1.bf16.msra.mxu0 %v413
      %437 = vmatprep.subr.bf16.mxu0 0
      %438 = vmatpush1.bf16.msra.mxu0 %v414
      %439 = vmatprep.subr.bf16.mxu0 0
      %440 = vmatpush1.bf16.msra.mxu0 0
      %441 = vmatprep.subr.bf16.mxu0 0
      %442 = vmatpush1.bf16.msra.mxu0 0
      %443 = vmatprep.subr.bf16.mxu0 0
      %444 = vmatpush1.bf16.msra.mxu0 0
      %445 = vmatprep.subr.bf16.mxu0 0
      %446 = vmatpush1.bf16.msra.mxu0 0
      %447 = vmatprep.subr.bf16.mxu0 0
      %448 = vmatpush1.bf16.msra.mxu0 0
      %449 = vmatprep.subr.bf16.mxu0 0
      %450 = vmatpush1.bf16.msra.mxu0 0
      %451 = vmatprep.subr.bf16.mxu0 0
      %452 = vmatpush1.bf16.msra.mxu0 0
      %453 = vmatprep.subr.bf16.mxu0 0
      %454 = vmatpush1.bf16.msra.mxu0 0
      %455 = vmatprep.mubr.bf16.mxu0 0
      %456 = vmatmul.mubr.bf16.gmra.mrb[0].mxu0 %v343
      %v457 = vpop.f32.mrb[0].mxu0
      %v458 = vadd.f32 0.0, %v457
      %v459 = vpop.f32.mrb[0].mxu0
      %v460 = vpop.f32.mrb[0].mxu0
      %v461 = vadd.f32 0.0, %v460
      %v462 = vpop.f32.mrb[0].mxu0
      %463 = vmatprep.mubr.bf16.mxu0 0
      %464 = vmatmul.mubr.bf16.gmra.mrb[0].mxu0 %v344
      %v465 = vpop.f32.mrb[0].mxu0
      %v466 = vadd.f32 0.0, %v465
      %v467 = vpop.f32.mrb[0].mxu0
      %v468 = vpop.f32.mrb[0].mxu0
      %v469 = vadd.f32 0.0, %v468
      %v470 = vpop.f32.mrb[0].mxu0
      %471 = vmatprep.mubr.bf16.mxu0 0
      %472 = vmatmul.mubr.bf16.gmra.mrb[0].mxu0 %v345
      %v473 = vpop.f32.mrb[0].mxu0
      %v474 = vadd.f32 0.0, %v473
      %v475 = vpop.f32.mrb[0].mxu0
      %v476 = vpop.f32.mrb[0].mxu0
      %v477 = vadd.f32 0.0, %v476
      %v478 = vpop.f32.mrb[0].mxu0
      %479 = vmatprep.mubr.bf16.mxu0 0
      %480 = vmatmul.mubr.bf16.gmra.mrb[0].mxu0 %v346
      %v481 = vpop.f32.mrb[0].mxu0
      %v482 = vadd.f32 0.0, %v481
      %v483 = vpop.f32.mrb[0].mxu0
      %v484 = vpop.f32.mrb[0].mxu0
      %v485 = vadd.f32 0.0, %v484
      %v486 = vpop.f32.mrb[0].mxu0
      %487 = vmatprep.mubr.bf16.mxu0 0
      %488 = vmatmul.mubr.bf16.gmra.mrb[0].mxu0 %v347
      %v489 = vpop.f32.mrb[0].mxu0
      %v490 = vadd.f32 0.0, %v489
      %v491 = vpop.f32.mrb[0].mxu0
      %v492 = vpop.f32.mrb[0].mxu0
      %v493 = vadd.f32 0.0, %v492
      %v494 = vpop.f32.mrb[0].mxu0
      %495 = vmatprep.mubr.bf16.mxu0 0
      %496 = vmatmul.mubr.bf16.gmra.mrb[0].mxu0 %v348
      %v497 = vpop.f32.mrb[0].mxu0
      %v498 = vadd.f32 0.0, %v497
      %v499 = vpop.f32.mrb[0].mxu0
      %v500 = vpop.f32.mrb[0].mxu0
      %v501 = vadd.f32 0.0, %v500
      %v502 = vpop.f32.mrb[0].mxu0
      %503 = vmatprep.mubr.bf16.mxu0 0
      %504 = vmatmul.mubr.bf16.gmra.mrb[0].mxu0 %v349
      %v505 = vpop.f32.mrb[0].mxu0
      %v506 = vadd.f32 0.0, %v505
      %v507 = vpop.f32.mrb[0].mxu0
      %v508 = vpop.f32.mrb[0].mxu0
      %v509 = vadd.f32 0.0, %v508
      %v510 = vpop.f32.mrb[0].mxu0
      %511 = vmatprep.mubr.bf16.mxu0 0
      %512 = vmatmul.mubr.bf16.gmra.mrb[0].mxu0 %v350
      %v513 = vpop.f32.mrb[0].mxu0
      %v514 = vadd.f32 0.0, %v513
      %v515 = vpop.f32.mrb[0].mxu0
      %v516 = vpop.f32.mrb[0].mxu0
      %v517 = vadd.f32 0.0, %v516
      %v518 = vpop.f32.mrb[0].mxu0
      %519 = vmatprep.mubr.bf16.mxu0 0
      %520 = vmatmul.mubr.bf16.gmra.mrb[0].mxu0 %v351
      %v521 = vpop.f32.mrb[0].mxu0
      %v522 = vadd.f32 0.0, %v521
      %v523 = vpop.f32.mrb[0].mxu0
      %v524 = vpop.f32.mrb[0].mxu0
      %v525 = vadd.f32 0.0, %v524
      %v526 = vpop.f32.mrb[0].mxu0
      %527 = vmatprep.mubr.bf16.mxu0 0
      %528 = vmatmul.mubr.bf16.gmra.mrb[0].mxu0 %v352
      %v529 = vpop.f32.mrb[0].mxu0
      %v530 = vadd.f32 0.0, %v529
      %v531 = vpop.f32.mrb[0].mxu0
      %v532 = vpop.f32.mrb[0].mxu0
      %v533 = vadd.f32 0.0, %v532
      %v534 = vpop.f32.mrb[0].mxu0
      %535 = vmatprep.mubr.bf16.mxu0 0
      %536 = vmatmul.mubr.bf16.gmra.mrb[0].mxu0 %v353
      %v537 = vpop.f32.mrb[0].mxu0
      %v538 = vadd.f32 0.0, %v537
      %v539 = vpop.f32.mrb[0].mxu0
      %v540 = vpop.f32.mrb[0].mxu0
      %v541 = vadd.f32 0.0, %v540
      %v542 = vpop.f32.mrb[0].mxu0
      %543 = vmatprep.mubr.bf16.mxu0 0
      %544 = vmatmul.mubr.bf16.gmra.mrb[0].mxu0 %v354
      %v545 = vpop.f32.mrb[0].mxu0
      %v546 = vadd.f32 0.0, %v545
      %v547 = vpop.f32.mrb[0].mxu0
      %v548 = vpop.f32.mrb[0].mxu0
      %v549 = vadd.f32 0.0, %v548
      %v550 = vpop.f32.mrb[0].mxu0
      %551 = vmatprep.mubr.bf16.mxu0 0
      %552 = vmatmul.mubr.bf16.gmra.mrb[0].mxu0 %v355
      %v553 = vpop.f32.mrb[0].mxu0
      %v554 = vadd.f32 0.0, %v553
      %v555 = vpop.f32.mrb[0].mxu0
      %v556 = vpop.f32.mrb[0].mxu0
      %v557 = vadd.f32 0.0, %v556
      %v558 = vpop.f32.mrb[0].mxu0
      %559 = vmatprep.mubr.bf16.mxu0 0
      %560 = vmatmul.mubr.bf16.gmra.mrb[0].mxu0 %v356
      %v561 = vpop.f32.mrb[0].mxu0
      %v562 = vadd.f32 0.0, %v561
      %v563 = vpop.f32.mrb[0].mxu0
      %v564 = vpop.f32.mrb[0].mxu0
      %v565 = vadd.f32 0.0, %v564
      %v566 = vpop.f32.mrb[0].mxu0
      %567 = vmatprep.mubr.bf16.mxu0 0
      %568 = vmatmul.mubr.bf16.gmra.mrb[0].mxu0 %v357
      %v569 = vpop.f32.mrb[0].mxu0
      %v570 = vadd.f32 0.0, %v569
      %v571 = vpop.f32.mrb[0].mxu0
      %v572 = vpop.f32.mrb[0].mxu0
      %v573 = vadd.f32 0.0, %v572
      %v574 = vpop.f32.mrb[0].mxu0
      %575 = vmatprep.mubr.bf16.mxu0 0
      %576 = vmatmul.mubr.bf16.gmra.mrb[0].mxu0 %v358
      %v577 = vpop.f32.mrb[0].mxu0
      %v578 = vadd.f32 0.0, %v577
      %v579 = vpop.f32.mrb[0].mxu0
      %v580 = vpop.f32.mrb[0].mxu0
      %v581 = vadd.f32 0.0, %v580
      %v582 = vpop.f32.mrb[0].mxu0
      %583 = vdwg.mxu0
      %v584 = vld [vmem:[%s222] sm:$0xff]
      %v585 = vld [vmem:[%s222 + $0x8] sm:$0xff]
      %v586 = vld [vmem:[%s222 + $0x10] sm:$0xff]
      %v587 = vld [vmem:[%s222 + $0x18] sm:$0xff]
      %v588 = vld [vmem:[%s222 + $0x20] sm:$0xff]
      %v589 = vld [vmem:[%s222 + $0x28] sm:$0xff]
      %v590 = vld [vmem:[%s222 + $0x30] sm:$0xff]
      %v591 = vld [vmem:[%s222 + $0x38] sm:$0xff]
      %v592 = vld [vmem:[%s222 + $0x40] sm:$0xff]
      %v593 = vld [vmem:[%s222 + $0x48] sm:$0xff]
      %v594 = vld [vmem:[%s222 + $0x50] sm:$0xff]
      %v595 = vld [vmem:[%s222 + $0x58] sm:$0xff]
      %v596 = vld [vmem:[%s222 + $0x60] sm:$0xff]
      %v597 = vld [vmem:[%s222 + $0x68] sm:$0xff]
      %v598 = vld [vmem:[%s222 + $0x70] sm:$0xff]
      %v599 = vld [vmem:[%s222 + $0x78] sm:$0xff]
      %v600 = vld [vmem:[%s222 + $0x80] sm:$0xff]
      %v601 = vld [vmem:[%s222 + $0x88] sm:$0xff]
      %v602 = vld [vmem:[%s222 + $0x90] sm:$0xff]
      %v603 = vld [vmem:[%s222 + $0x98] sm:$0xff]
      %v604 = vld [vmem:[%s222 + $0xa0] sm:$0xff]
      %v605 = vld [vmem:[%s222 + $0xa8] sm:$0xff]
      %v606 = vld [vmem:[%s222 + $0xb0] sm:$0xff]
      %v607 = vld [vmem:[%s222 + $0xb8] sm:$0xff]
      %v608 = vld [vmem:[%s222 + $0xc0] sm:$0xff]
      %v609 = vld [vmem:[%s222 + $0xc8] sm:$0xff]
      %v610 = vld [vmem:[%s222 + $0xd0] sm:$0xff]
      %v611 = vld [vmem:[%s222 + $0xd8] sm:$0xff]
      %v612 = vld [vmem:[%s222 + $0xe0] sm:$0xff]
      %v613 = vld [vmem:[%s222 + $0xe8] sm:$0xff]
      %v614 = vld [vmem:[%s222 + $0xf0] sm:$0xff]
      %v615 = vld [vmem:[%s222 + $0xf8] sm:$0xff]
      %617 = vset.pattern.permute.xlu0 0
      %618 = vperm.xlu0 %617, %v584
      %v619 = vpop.permute.xlu0 %618
      %622 = vset.pattern.permute.xlu0 0
      %623 = vperm.xlu0 %622, %v585
      %v624 = vpop.permute.xlu0 %623
      %627 = vset.pattern.permute.xlu0 0
      %628 = vperm.xlu0 %627, %v586
      %v629 = vpop.permute.xlu0 %628
      %632 = vset.pattern.permute.xlu0 0
      %633 = vperm.xlu0 %632, %v587
      %v634 = vpop.permute.xlu0 %633
      %637 = vset.pattern.permute.xlu0 0
      %638 = vperm.xlu0 %637, %v588
      %v639 = vpop.permute.xlu0 %638
      %642 = vset.pattern.permute.xlu0 0
      %643 = vperm.xlu0 %642, %v589
      %v644 = vpop.permute.xlu0 %643
      %647 = vset.pattern.permute.xlu0 0
      %648 = vperm.xlu0 %647, %v590
      %v649 = vpop.permute.xlu0 %648
      %652 = vset.pattern.permute.xlu0 0
      %653 = vperm.xlu0 %652, %v591
      %v654 = vpop.permute.xlu0 %653
      %657 = vset.pattern.permute.xlu0 0
      %658 = vperm.xlu0 %657, %v592
      %v659 = vpop.permute.xlu0 %658
      %662 = vset.pattern.permute.xlu0 0
      %663 = vperm.xlu0 %662, %v593
      %v664 = vpop.permute.xlu0 %663
      %667 = vset.pattern.permute.xlu0 0
      %668 = vperm.xlu0 %667, %v594
      %v669 = vpop.permute.xlu0 %668
      %672 = vset.pattern.permute.xlu0 0
      %673 = vperm.xlu0 %672, %v595
      %v674 = vpop.permute.xlu0 %673
      %677 = vset.pattern.permute.xlu0 0
      %678 = vperm.xlu0 %677, %v596
      %v679 = vpop.permute.xlu0 %678
      %682 = vset.pattern.permute.xlu0 0
      %683 = vperm.xlu0 %682, %v597
      %v684 = vpop.permute.xlu0 %683
      %687 = vset.pattern.permute.xlu0 0
      %688 = vperm.xlu0 %687, %v598
      %v689 = vpop.permute.xlu0 %688
      %692 = vset.pattern.permute.xlu0 0
      %693 = vperm.xlu0 %692, %v599
      %v694 = vpop.permute.xlu0 %693
      %697 = vset.pattern.permute.xlu0 0
      %698 = vperm.xlu0 %697, %v600
      %v699 = vpop.permute.xlu0 %698
      %702 = vset.pattern.permute.xlu0 0
      %703 = vperm.xlu0 %702, %v601
      %v704 = vpop.permute.xlu0 %703
      %707 = vset.pattern.permute.xlu0 0
      %708 = vperm.xlu0 %707, %v602
      %v709 = vpop.permute.xlu0 %708
      %712 = vset.pattern.permute.xlu0 0
      %713 = vperm.xlu0 %712, %v603
      %v714 = vpop.permute.xlu0 %713
      %717 = vset.pattern.permute.xlu0 0
      %718 = vperm.xlu0 %717, %v604
      %v719 = vpop.permute.xlu0 %718
      %722 = vset.pattern.permute.xlu0 0
      %723 = vperm.xlu0 %722, %v605
      %v724 = vpop.permute.xlu0 %723
      %727 = vset.pattern.permute.xlu0 0
      %728 = vperm.xlu0 %727, %v606
      %v729 = vpop.permute.xlu0 %728
      %732 = vset.pattern.permute.xlu0 0
      %733 = vperm.xlu0 %732, %v607
      %v734 = vpop.permute.xlu0 %733
      %737 = vset.pattern.permute.xlu0 0
      %738 = vperm.xlu0 %737, %v608
      %v739 = vpop.permute.xlu0 %738
      %742 = vset.pattern.permute.xlu0 0
      %743 = vperm.xlu0 %742, %v609
      %v744 = vpop.permute.xlu0 %743
      %747 = vset.pattern.permute.xlu0 0
      %748 = vperm.xlu0 %747, %v610
      %v749 = vpop.permute.xlu0 %748
      %752 = vset.pattern.permute.xlu0 0
      %753 = vperm.xlu0 %752, %v611
      %v754 = vpop.permute.xlu0 %753
      %757 = vset.pattern.permute.xlu0 0
      %758 = vperm.xlu0 %757, %v612
      %v759 = vpop.permute.xlu0 %758
      %762 = vset.pattern.permute.xlu0 0
      %763 = vperm.xlu0 %762, %v613
      %v764 = vpop.permute.xlu0 %763
      %767 = vset.pattern.permute.xlu0 0
      %768 = vperm.xlu0 %767, %v614
      %v769 = vpop.permute.xlu0 %768
      %772 = vset.pattern.permute.xlu0 0
      %773 = vperm.xlu0 %772, %v615
      %v774 = vpop.permute.xlu0 %773
      %v776 = vmul.f32 %v619, %v458
      %v777 = vmul.f32 %v624, %v461
      %v778 = vmul.f32 %v629, %v466
      %v779 = vmul.f32 %v634, %v469
      %v780 = vmul.f32 %v639, %v474
      %v781 = vmul.f32 %v644, %v477
      %v782 = vmul.f32 %v649, %v482
      %v783 = vmul.f32 %v654, %v485
      %v784 = vmul.f32 %v659, %v490
      %v785 = vmul.f32 %v664, %v493
      %v786 = vmul.f32 %v669, %v498
      %v787 = vmul.f32 %v674, %v501
      %v788 = vmul.f32 %v679, %v506
      %v789 = vmul.f32 %v684, %v509
      %v790 = vmul.f32 %v689, %v514
      %v791 = vmul.f32 %v694, %v517
      %v792 = vmul.f32 %v699, %v522
      %v793 = vmul.f32 %v704, %v525
      %v794 = vmul.f32 %v709, %v530
      %v795 = vmul.f32 %v714, %v533
      %v796 = vmul.f32 %v719, %v538
      %v797 = vmul.f32 %v724, %v541
      %v798 = vmul.f32 %v729, %v546
      %v799 = vmul.f32 %v734, %v549
      %v800 = vmul.f32 %v739, %v554
      %v801 = vmul.f32 %v744, %v557
      %v802 = vmul.f32 %v749, %v562
      %v803 = vmul.f32 %v754, %v565
      %v804 = vmul.f32 %v759, %v570
      %v805 = vmul.f32 %v764, %v573
      %v806 = vmul.f32 %v769, %v578
      %v807 = vmul.f32 %v774, %v581
      %808 = vst [vmem:[%s228] sm:$0xff] %v776
      %809 = vst [vmem:[%s228 + $0x8] sm:$0xff] %v777
      %810 = vst [vmem:[%s228 + $0x10] sm:$0xff] %v778
      %811 = vst [vmem:[%s228 + $0x18] sm:$0xff] %v779
      %812 = vst [vmem:[%s228 + $0x20] sm:$0xff] %v780
      %813 = vst [vmem:[%s228 + $0x28] sm:$0xff] %v781
      %814 = vst [vmem:[%s228 + $0x30] sm:$0xff] %v782
      %815 = vst [vmem:[%s228 + $0x38] sm:$0xff] %v783
      %816 = vst [vmem:[%s228 + $0x40] sm:$0xff] %v784
      %817 = vst [vmem:[%s228 + $0x48] sm:$0xff] %v785
      %818 = vst [vmem:[%s228 + $0x50] sm:$0xff] %v786
      %819 = vst [vmem:[%s228 + $0x58] sm:$0xff] %v787
      %820 = vst [vmem:[%s228 + $0x60] sm:$0xff] %v788
      %821 = vst [vmem:[%s228 + $0x68] sm:$0xff] %v789
      %822 = vst [vmem:[%s228 + $0x70] sm:$0xff] %v790
      %823 = vst [vmem:[%s228 + $0x78] sm:$0xff] %v791
      %824 = vst [vmem:[%s228 + $0x80] sm:$0xff] %v792
      %825 = vst [vmem:[%s228 + $0x88] sm:$0xff] %v793
      %826 = vst [vmem:[%s228 + $0x90] sm:$0xff] %v794
      %827 = vst [vmem:[%s228 + $0x98] sm:$0xff] %v795
      %828 = vst [vmem:[%s228 + $0xa0] sm:$0xff] %v796
      %829 = vst [vmem:[%s228 + $0xa8] sm:$0xff] %v797
      %830 = vst [vmem:[%s228 + $0xb0] sm:$0xff] %v798
      %831 = vst [vmem:[%s228 + $0xb8] sm:$0xff] %v799
      %832 = vst [vmem:[%s228 + $0xc0] sm:$0xff] %v800
      %833 = vst [vmem:[%s228 + $0xc8] sm:$0xff] %v801
      %834 = vst [vmem:[%s228 + $0xd0] sm:$0xff] %v802
      %835 = vst [vmem:[%s228 + $0xd8] sm:$0xff] %v803
      %836 = vst [vmem:[%s228 + $0xe0] sm:$0xff] %v804
      %837 = vst [vmem:[%s228 + $0xe8] sm:$0xff] %v805
      %838 = vst [vmem:[%s228 + $0xf0] sm:$0xff] %v806
      %839 = vst [vmem:[%s228 + $0xf8] sm:$0xff] %v807
      %s840 = smul.u32 32, %s21
      %p841 = scmp.lt.s32.totalorder %s840, 159
      %s842 = scalar_select %p841, %s840, 159
      %s843 = smul.addr %s842, 8
      %s844 = scalar_lea.vmem %s4, %s843
      // Predicated region
      $region33: #{cola_moe_forward.1} parent=31 // pred_check
        %p845 = pneg %p119
      $region34: #{cola_moe_forward.1} parent=31 // pred_check_branch
        %847 = sbr.rel (%p845) target = $region36
      $region35: #{cola_moe_forward.1} parent=31 // pred_region
        %s848 = smul.u32 32, %s21
      $region36: #{cola_moe_forward.1} parent=31 // pred_fallthru
        _
    $region32: #{cola_moe_forward.1} parent=5 // pred_fallthru
      _
    %p849 = scmp.le.s32.totalorder 2, %s16
    // Predicated region
    $region37: #{cola_moe_forward.1} parent=5 // pred_check
      %p850 = pneg %p849
    $region38: #{cola_moe_forward.1} parent=5 // pred_check_branch
      %852 = sbr.rel (%p850) target = $region40
    $region39: #{cola_moe_forward.1} parent=5 // pred_region
      %s853 = ssub.s32 %s16, 2
      // Predicated region
      $region41: #{cola_moe_forward.1} parent=39 // pred_check
        %p854 = pneg %p125
      $region42: #{cola_moe_forward.1} parent=39 // pred_check_branch
        %856 = sbr.rel (%p854) target = $region44
      $region43: #{cola_moe_forward.1} parent=39 // pred_region
        %s857 = smul.u32 32, %s22
        %p858 = scmp.lt.s32.totalorder %s857, 159
        %s859 = scalar_select %p858, %s857, 159
        %s860 = smul.addr %s859, 8
        %s861 = scalar_lea.vmem %s4, %s860
      $region44: #{cola_moe_forward.1} parent=39 // pred_fallthru
        _
    $region40: #{cola_moe_forward.1} parent=5 // pred_fallthru
      _
  $region6: #{cola_moe_forward.1} parent=0 // loop_footer
    %s20 = sadd.s32 1, %s16
  $region7: #{cola_moe_forward.1} parent=0 // loop_footer_branch
    %15 = sbr.rel target = $region3
  $region8: #{cola_moe_forward.1} parent=0 // loop_exit
    _

</llo_original>
